<compile_context>
chip_gen: v7x
topology: tpu7x:2x2x1
jax: 0.10.0
libtpu: 0.0.40
codegen_flags: <defaults>
</compile_context>

<pallas_src>
import jax
import jax.numpy as jnp
from jax.experimental import pallas as pl
from jax.experimental.pallas import tpu as pltpu


def attentive_kernel(x_ref, w_ref, o_ref):
    # x_ref: (tm, tn), w_ref: (1, tn) — broadcast multiply over sublanes (VPU only).
    o_ref[...] = x_ref[...] * w_ref[...]


def _select_tiles(m, n, itemsize,
                  block_budget_bytes=3 << 20,   # ~3 MiB per x block
                  lane_cap_bytes=16 << 10):     # per-row byte cap before splitting N
    # Dtype-dependent sublane multiple: 8 (f32), 16 (bf16), 32 (int8/fp8).
    sub = max(8, 32 // itemsize)

    # --- lane (N) tile: full extent unless N is wide and a clean multiple of 128 ---
    if n * itemsize <= lane_cap_bytes or n % 128 != 0:
        tn = n                                   # full last dim is always legal
    else:
        tn = max(128, ((lane_cap_bytes // itemsize) // 128) * 128)
        tn = min(tn, n)

    # --- sublane (M) tile from the VMEM byte budget ---
    tm = block_budget_bytes // max(1, tn * itemsize)
    tm = max(sub, (tm // sub) * sub)
    tm = min(tm, m)

    # v7x has 2 TensorCores; a "parallel" row axis only helps with >= 2 grid steps.
    if tm >= m and m >= 2 * sub:
        half = (m + 1) // 2
        tm = min(m, ((half + sub - 1) // sub) * sub)

    return tm, tn


def attentive(x, w):
    """Forward pass of Attentive: x @ diag(w) == x * w (broadcast on last dim).

    x: float array of shape (..., N); w: float array of shape (N,).
    Note: w is cast to x's dtype, so for bf16 x the scale is applied in bf16.
    """
    orig_shape = x.shape
    n = orig_shape[-1]
    assert w.shape == (n,), f"w must have shape ({n},), got {w.shape}"

    # Flatten leading dims into a single row axis -> lane-dense 2-D slab.
    x2 = x.reshape(-1, n)
    m = x2.shape[0]
    itemsize = jnp.dtype(x2.dtype).itemsize

    tm, tn = _select_tiles(m, n, itemsize)
    grid = (pl.cdiv(m, tm), pl.cdiv(n, tn))

    w2 = w.reshape(1, n).astype(x2.dtype)

    # Memory-bound streaming multiply: read x, read w once, write out.
    cost = pl.CostEstimate(
        flops=m * n,
        transcendentals=0,
        bytes_accessed=2 * m * n * itemsize + n * itemsize,
    )

    out = pl.pallas_call(
        attentive_kernel,
        out_shape=jax.ShapeDtypeStruct((m, n), x2.dtype),
        grid=grid,
        in_specs=[
            pl.BlockSpec((tm, tn), lambda i, j: (i, j)),   # x tile
            pl.BlockSpec((1, tn), lambda i, j: (0, j)),    # w replicated over rows
        ],
        out_specs=pl.BlockSpec((tm, tn), lambda i, j: (i, j)),
        compiler_params=pltpu.CompilerParams(
            dimension_semantics=("parallel", "parallel"),
            vmem_limit_bytes=32 << 20,
        ),
        cost_estimate=cost,
    )(x2, w2)

    return out.reshape(orig_shape)


if __name__ == "__main__":
    key = jax.random.PRNGKey(0)
    k_x, k_w = jax.random.split(key)

    # Small shapes implied by the forward: x (..., isize), w (isize,).
    batch, seq, isize = 4, 64, 128
    x = jax.random.normal(k_x, (batch, seq, isize), dtype=jnp.float32)
    # The module initializes w to ones; use a random w so the check is
    # non-trivial (forward semantics are identical for any parameter value).
    w = jax.random.normal(k_w, (isize,), dtype=jnp.float32)

    out = attentive(x, w)
    jax.block_until_ready(out)

    # Reference: x @ diag(w) == x * w broadcast over the last dim.
    ref = x * w[None, None, :]
    assert out.shape == x.shape
    assert jnp.allclose(out, ref, rtol=1e-6, atol=1e-6)

    # Also check with w = ones (the module's actual initialization): identity.
    out_ones = attentive(x, jnp.ones((isize,), jnp.float32))
    jax.block_until_ready(out_ones)
    assert jnp.allclose(out_ones, x, rtol=1e-6, atol=1e-6)

    print("KERNEL_OK")
</pallas_src>

<mosaic_0001>
module attributes {stable_mosaic.version = 11 : i64} {
  func.func @attentive_kernel(%arg0: i32, %arg1: i32, %arg2: memref<128x128xf32, #tpu.memory_space<vmem>>, %arg3: memref<1x128xf32, #tpu.memory_space<vmem>>, %arg4: memref<128x128xf32, #tpu.memory_space<vmem>>) attributes {dimension_semantics = [#tpu.dimension_semantics<parallel>, #tpu.dimension_semantics<parallel>], iteration_bounds = array<i64: 2, 1>, scalar_prefetch = 0 : i64, scratch_operands = 0 : i64, tpu.core_type = #tpu.core_type<tc>, window_params = [{transform_indices = @transform_0, window_bounds = array<i64: 128, 128>}, {transform_indices = @transform_1, window_bounds = array<i64: 1, 128>}, {transform_indices = @transform_2, window_bounds = array<i64: 128, 128>}]} {
    %c0 = arith.constant 0 : index
    %c0_0 = arith.constant 0 : index
    %0 = vector.load %arg2[%c0, %c0_0] : memref<128x128xf32, #tpu.memory_space<vmem>>, vector<128x128xf32>
    %c0_1 = arith.constant 0 : index
    %c0_2 = arith.constant 0 : index
    %1 = vector.load %arg3[%c0_1, %c0_2] : memref<1x128xf32, #tpu.memory_space<vmem>>, vector<1x128xf32>
    %2 = vector.broadcast %1 : vector<1x128xf32> to vector<128x128xf32>
    %3 = arith.mulf %0, %2 : vector<128x128xf32>
    %c0_3 = arith.constant 0 : index
    %c0_4 = arith.constant 0 : index
    %4 = vector.load %arg4[%c0_3, %c0_4] : memref<128x128xf32, #tpu.memory_space<vmem>>, vector<128x128xf32>
    tpu.vector_store %arg4[%c0_3, %c0_4], %3 {strides = array<i32>} : memref<128x128xf32, #tpu.memory_space<vmem>>, vector<128x128xf32>,
    return
  }
  func.func @transform_0(%arg0: i32, %arg1: i32) -> (i32, i32) {
    %c0_i32 = arith.constant 0 : i32
    return %arg0, %arg1 : i32, i32
  }
  func.func @transform_1(%arg0: i32, %arg1: i32) -> (i32, i32) {
    %c0_i32 = arith.constant 0 : i32
    %c0_i32_0 = arith.constant 0 : i32
    return %c0_i32, %arg1 : i32, i32
  }
  func.func @transform_2(%arg0: i32, %arg1: i32) -> (i32, i32) {
    %c0_i32 = arith.constant 0 : i32
    return %arg0, %arg1 : i32, i32
  }
}

</mosaic_0001>

<llo_original>
// kernel: tpu_custom_call.1
$region0: #{tpu_custom_call.1}
  #allocation0 [shape = 'u32[]', space=smem, size = 0x4, offset = 0x4, fixed_abs, tag = 'smem constant byte address 0x4 - core index']
  #allocation1 [shape = 'u32[144,128]{1,0:T(1,128)}', space=vmem, size = 0x12000, scoped, tag = 'internal scratch']
  %s0 = inlined_call_operand.hbm [shape: f32[256,128], index: 0, kind: input, shape index: {}]
  %s1 = inlined_call_operand.vmem [shape: f32[1,128], index: 1, kind: input, shape index: {}]
  %s2 = inlined_call_operand.hbm [shape: f32[256,128], index: 2, kind: output, shape index: {}]
  %s3 = sld [smem:[#allocation0]]
  $region45: #{tpu_custom_call.1} parent=0
    _
  %s5 = ssub.s32 1, %s3
  %s6 = scalar_select 0, %s5, %s3
  $region1: #{tpu_custom_call.1} parent=0
    #allocation2 [shape = 'u8[131072]{0}', space=vmem, size = 0x20000, scoped, tag = 'input window, operand 0']
    #allocation3 [shape = 's32[2]{0}', space=sflag, size = 0x8, scoped, tag = 'scoped memory for tpu_custom_call.1']
    #allocation4 [shape = 's32[2]{0}', space=sflag, size = 0x8, scoped, tag = 'scoped memory for tpu_custom_call.1']
    #allocation5 [shape = 'u8[131072]{0}', space=vmem, size = 0x20000, scoped, tag = 'output window, operand 0']
    %7 = vsyncpa [#allocation3], 0
    %s8 = scalar_lea.sflag [#allocation3], 1
    %9 = vsyncpa %s8, 0
    %10 = vsyncpa [#allocation4], 0
    %s11 = scalar_lea.sflag [#allocation4], 1
    %12 = vsyncpa %s11, 0
    loop: start=0, step=1, limit=4
    $region2: #{tpu_custom_call.1} parent=1 // loop_pre_header
      _
    $region3: #{tpu_custom_call.1} parent=1 // loop_header
      %s14 = sphi 0, %s18
      %p15 = scmp.ge.s32.totalorder %s14, 4
      %s21 = sphi 0, %s33
      %s22 = sphi 0, %s29
      %s23 = sphi 0, %s21
      %s24 = sphi 0, %s22
      %s25 = sphi 0, %s23
      %s26 = sphi 0, %s24
      %s38 = sphi 0, %s40
      %s41 = sphi 0, %s38
      %s42 = sphi 0, %s41
      %s58 = sphi 0, %s42
      %s64 = sphi 0, %s66
      %s67 = sphi 0, %s64
      %s68 = sphi 0, %s67
      %s84 = sphi 0, %s68
      %s92 = sphi 0, %s94
      %s95 = sphi 0, %s92
      %s96 = sphi 0, %s95
      %s112 = sphi 0, %s96
    $region4: #{tpu_custom_call.1} parent=1 // loop_header_branch
      %17 = sbr.rel (%p15) target = $region8
    $region5: #{tpu_custom_call.1} parent=1 // loop_body
      %s19 = ssub.s32 %s14, 1
      %s20 = ssub.s32 %s14, 2
      %s27 = sadd.s32 1, %s22
      %p28 = scmp.ge.s32.totalorder %s27, 1
      %s29 = scalar_select %p28, 0, %s27
      %s30 = sadd.s32 1, %s21
      %s31 = scalar_select %p28, %s30, %s21
      %p32 = scmp.ge.s32.totalorder %s31, 2
      %s33 = scalar_select %p32, 0, %s31
      %s34 = ssub.s32 %s21, %s33
      %s35 = ssub.s32 %s22, %s29
      %s36 = sor.u32 %s34, %s35
      %p37 = scmp.eq.s32.totalorder %s36, 0
      %s39 = sadd.s32 %s38, 1
      %s40 = scalar_select %p37, %s38, %s39
      %p43 = pneg %p37
      %p44 = scmp.eq.s32.totalorder %s14, 1
      %p45 = por %p43, %p44
      %p46 = scmp.ne.s32.totalorder %s38, %s41
      %p47 = scmp.eq.s32.totalorder %s14, 0
      %p48 = por %p46, %p47
      %p49 = scmp.ne.s32.totalorder %s38, %s41
      %p50 = scmp.eq.s32.totalorder %s19, 1
      %p51 = por %p49, %p50
      %p52 = scmp.ne.s32.totalorder %s41, %s42
      %p53 = scmp.eq.s32.totalorder %s19, 0
      %p54 = por %p52, %p53
      %p55 = scmp.ne.s32.totalorder %s41, %s42
      %p56 = scmp.eq.s32.totalorder %s20, 1
      %p57 = por %p55, %p56
      %p59 = scmp.ne.s32.totalorder %s42, %s58
      %p60 = scmp.eq.s32.totalorder %s20, 0
      %p61 = por %p59, %p60
      %s62 = ssub.s32 %s22, %s29
      %p63 = scmp.eq.s32.totalorder %s62, 0
      %s65 = sadd.s32 %s64, 1
      %s66 = scalar_select %p63, %s64, %s65
      %p69 = pneg %p63
      %p70 = scmp.eq.s32.totalorder %s14, 1
      %p71 = por %p69, %p70
      %p72 = scmp.ne.s32.totalorder %s64, %s67
      %p73 = scmp.eq.s32.totalorder %s14, 0
      %p74 = por %p72, %p73
      %p75 = scmp.ne.s32.totalorder %s64, %s67
      %p76 = scmp.eq.s32.totalorder %s19, 1
      %p77 = por %p75, %p76
      %p78 = scmp.ne.s32.totalorder %s67, %s68
      %p79 = scmp.eq.s32.totalorder %s19, 0
      %p80 = por %p78, %p79
      %p81 = scmp.ne.s32.totalorder %s67, %s68
      %p82 = scmp.eq.s32.totalorder %s20, 1
      %p83 = por %p81, %p82
      %p85 = scmp.ne.s32.totalorder %s68, %s84
      %p86 = scmp.eq.s32.totalorder %s20, 0
      %p87 = por %p85, %p86
      %s88 = ssub.s32 %s21, %s33
      %s89 = ssub.s32 %s22, %s29
      %s90 = sor.u32 %s88, %s89
      %p91 = scmp.eq.s32.totalorder %s90, 0
      %s93 = sadd.s32 %s92, 1
      %s94 = scalar_select %p91, %s92, %s93
      %p97 = pneg %p91
      %p98 = scmp.eq.s32.totalorder %s14, 1
      %p99 = por %p97, %p98
      %p100 = scmp.ne.s32.totalorder %s92, %s95
      %p101 = scmp.eq.s32.totalorder %s14, 0
      %p102 = por %p100, %p101
      %p103 = scmp.ne.s32.totalorder %s92, %s95
      %p104 = scmp.eq.s32.totalorder %s19, 1
      %p105 = por %p103, %p104
      %p106 = scmp.ne.s32.totalorder %s95, %s96
      %p107 = scmp.eq.s32.totalorder %s19, 0
      %p108 = por %p106, %p107
      %p109 = scmp.ne.s32.totalorder %s95, %s96
      %p110 = scmp.eq.s32.totalorder %s20, 1
      %p111 = por %p109, %p110
      %p113 = scmp.ne.s32.totalorder %s96, %s112
      %p114 = scmp.eq.s32.totalorder %s20, 0
      %p115 = por %p113, %p114
      %p116 = scmp.le.s32.totalorder 1, %s14
      %p117 = scmp.lt.s32.totalorder %s14, 3
      %p118 = pnand %p116, %p117
      %p119 = pneg %p118
      // Predicated region
      $region9: #{tpu_custom_call.1} parent=5 // pred_check
        _
      $region10: #{tpu_custom_call.1} parent=5 // pred_check_branch
        %121 = sbr.rel (%p118) target = $region12
      $region11: #{tpu_custom_call.1} parent=5 // pred_region
        %s122 = ssub.s32 %s14, 1
        // Predicated region
        $region13: #{tpu_custom_call.1} parent=11 // pred_check
          %p123 = pneg %p80
        $region14: #{tpu_custom_call.1} parent=11 // pred_check_branch
          %125 = sbr.rel (%p123) target = $region16
        $region15: #{tpu_custom_call.1} parent=11 // pred_region
          %p126 = scmp.lt.s32.totalorder %s24, 0
          %s127 = scalar_select %p126, %s24, 0
          %s128 = scalar_lea.vmem %s1, %s127
        $region16: #{tpu_custom_call.1} parent=11 // pred_fallthru
          _
      $region12: #{tpu_custom_call.1} parent=5 // pred_fallthru
        _
      %p129 = scmp.lt.s32.totalorder %s14, 2
      // Predicated region
      $region17: #{tpu_custom_call.1} parent=5 // pred_check
        %p130 = pneg %p129
      $region18: #{tpu_custom_call.1} parent=5 // pred_check_branch
        %132 = sbr.rel (%p130) target = $region20
      $region19: #{tpu_custom_call.1} parent=5 // pred_region
        // Predicated region
        $region21: #{tpu_custom_call.1} parent=19 // pred_check
          %p133 = pneg %p48
        $region22: #{tpu_custom_call.1} parent=19 // pred_check_branch
          %135 = sbr.rel (%p133) target = $region24
        $region23: #{tpu_custom_call.1} parent=19 // pred_region
          %s136 = sand.u32 %s38, 1
          %s137 = scalar_lea.sflag [#allocation3], %s136
          %s138 = sand.u32 %s38, 1
          %s139 = smul.addr %s138, 128
          %s140 = scalar_lea.vmem [#allocation2], %s139
          %s141 = smul.u32 16, %s21
          %s143 = ssub.s32 2048, 2048
          %144 = vsyncadd %s137, %s143
          %s145 = sadd.s32 %s22, %s141
          %s146 = smul.addr %s145, 128
          %s147 = scalar_lea.hbm %s0, %s146
          %s148 = sshll.u32 %s140, 4
          %s149 = int_to_ptr.vmem [resolvable:$true] %s148
          %154 = dma.hbm_to_vmem [thread:$0]  %s147, 2048, %s149, %s137, 128, 128, 8
        $region24: #{tpu_custom_call.1} parent=19 // pred_fallthru
          _
      $region20: #{tpu_custom_call.1} parent=5 // pred_fallthru
        _
      %p155 = scmp.le.s32.totalorder 1, %s14
      %p156 = scmp.lt.s32.totalorder %s14, 3
      %p157 = pnand %p155, %p156
      %p158 = pneg %p157
      // Predicated region
      $region25: #{tpu_custom_call.1} parent=5 // pred_check
        _
      $region26: #{tpu_custom_call.1} parent=5 // pred_check_branch
        %160 = sbr.rel (%p157) target = $region28
      $region27: #{tpu_custom_call.1} parent=5 // pred_region
        %s161 = ssub.s32 %s14, 1
        %s162 = sand.u32 %s41, 1
        %s163 = scalar_lea.sflag [#allocation3], %s162
        %s164 = sand.u32 %s41, 1
        %s165 = smul.addr %s164, 128
        %s166 = scalar_lea.vmem [#allocation2], %s165
        // Predicated region
        $region29: #{tpu_custom_call.1} parent=27 // pred_check
          %p167 = pneg %p54
        $region30: #{tpu_custom_call.1} parent=27 // pred_check_branch
          %169 = sbr.rel (%p167) target = $region32
        $region31: #{tpu_custom_call.1} parent=27 // pred_region
          %170 = dma.done %s163, 2048
        $region32: #{tpu_custom_call.1} parent=27 // pred_fallthru
          _
        %s171 = sand.u32 %s41, 1
        %s172 = scalar_lea.sflag [#allocation3], %s171
        %s173 = sand.u32 %s41, 1
        %s174 = smul.addr %s173, 128
        %s175 = scalar_lea.vmem [#allocation2], %s174
        %p176 = pneg %p54
        %p177 = pneg %p51
        %p178 = scmp.lt.s32.totalorder %s24, 0
        %s179 = scalar_select %p178, %s24, 0
        %s180 = scalar_lea.vmem %s1, %s179
        %p181 = pneg %p80
        %p182 = pneg %p77
        %p183 = pneg %p108
        %p184 = pneg %p105
        %s185 = sand.u32 %s95, 1
        %s186 = scalar_lea.sflag [#allocation4], %s185
        %s187 = sand.u32 %s95, 1
        %s188 = smul.addr %s187, 128
        %s189 = scalar_lea.vmem [#allocation5], %s188
        %s190 = smul.u32 16, %s23
        %p191 = scmp.lt.s32.totalorder %s24, 0
        %s192 = scalar_select %p191, %s24, 0
        %s193 = scalar_lea.vmem %s1, %s192
        %s194 = smul.u32 16, %s23
        %v195 = vld [vmem:[%s166] sm:$0xff]
        %v196 = vld [vmem:[%s166 + $0x8] sm:$0xff]
        %v197 = vld [vmem:[%s166 + $0x10] sm:$0xff]
        %v198 = vld [vmem:[%s166 + $0x18] sm:$0xff]
        %v199 = vld [vmem:[%s166 + $0x20] sm:$0xff]
        %v200 = vld [vmem:[%s166 + $0x28] sm:$0xff]
        %v201 = vld [vmem:[%s166 + $0x30] sm:$0xff]
        %v202 = vld [vmem:[%s166 + $0x38] sm:$0xff]
        %v203 = vld [vmem:[%s166 + $0x40] sm:$0xff]
        %v204 = vld [vmem:[%s166 + $0x48] sm:$0xff]
        %v205 = vld [vmem:[%s166 + $0x50] sm:$0xff]
        %v206 = vld [vmem:[%s166 + $0x58] sm:$0xff]
        %v207 = vld [vmem:[%s166 + $0x60] sm:$0xff]
        %v208 = vld [vmem:[%s166 + $0x68] sm:$0xff]
        %v209 = vld [vmem:[%s166 + $0x70] sm:$0xff]
        %v210 = vld [vmem:[%s166 + $0x78] sm:$0xff]
        %v211 = vld [vmem:[%s193] sm:$0x1]
        %v213 = vlaneseq
        %v214 = vshrl.u32 %v213, 7
        %v215 = vsub.s32 0, %v214
        %v216 = vrot.slane %v211, %v215
        %v218 = vmul.f32 %v195, %v216
        %v219 = vmul.f32 %v196, %v216
        %v220 = vmul.f32 %v197, %v216
        %v221 = vmul.f32 %v198, %v216
        %v222 = vmul.f32 %v199, %v216
        %v223 = vmul.f32 %v200, %v216
        %v224 = vmul.f32 %v201, %v216
        %v225 = vmul.f32 %v202, %v216
        %v226 = vmul.f32 %v203, %v216
        %v227 = vmul.f32 %v204, %v216
        %v228 = vmul.f32 %v205, %v216
        %v229 = vmul.f32 %v206, %v216
        %v230 = vmul.f32 %v207, %v216
        %v231 = vmul.f32 %v208, %v216
        %v232 = vmul.f32 %v209, %v216
        %v233 = vmul.f32 %v210, %v216
        %234 = vst [vmem:[%s189] sm:$0xff] %v218
        %235 = vst [vmem:[%s189 + $0x8] sm:$0xff] %v219
        %236 = vst [vmem:[%s189 + $0x10] sm:$0xff] %v220
        %237 = vst [vmem:[%s189 + $0x18] sm:$0xff] %v221
        %238 = vst [vmem:[%s189 + $0x20] sm:$0xff] %v222
        %239 = vst [vmem:[%s189 + $0x28] sm:$0xff] %v223
        %240 = vst [vmem:[%s189 + $0x30] sm:$0xff] %v224
        %241 = vst [vmem:[%s189 + $0x38] sm:$0xff] %v225
        %242 = vst [vmem:[%s189 + $0x40] sm:$0xff] %v226
        %243 = vst [vmem:[%s189 + $0x48] sm:$0xff] %v227
        %244 = vst [vmem:[%s189 + $0x50] sm:$0xff] %v228
        %245 = vst [vmem:[%s189 + $0x58] sm:$0xff] %v229
        %246 = vst [vmem:[%s189 + $0x60] sm:$0xff] %v230
        %247 = vst [vmem:[%s189 + $0x68] sm:$0xff] %v231
        %248 = vst [vmem:[%s189 + $0x70] sm:$0xff] %v232
        %249 = vst [vmem:[%s189 + $0x78] sm:$0xff] %v233
        %s250 = sand.u32 %s95, 1
        %s251 = scalar_lea.sflag [#allocation4], %s250
        %s252 = sand.u32 %s95, 1
        %s253 = smul.addr %s252, 128
        %s254 = scalar_lea.vmem [#allocation5], %s253
        // Predicated region
        $region33: #{tpu_custom_call.1} parent=27 // pred_check
          %p255 = pneg %p105
        $region34: #{tpu_custom_call.1} parent=27 // pred_check_branch
          %257 = sbr.rel (%p255) target = $region36
        $region35: #{tpu_custom_call.1} parent=27 // pred_region
          %s258 = smul.u32 16, %s23
          %s260 = ssub.s32 2048, 2048
          %261 = vsyncadd %s251, %s260
          %s262 = sadd.s32 %s24, %s258
          %s263 = smul.addr %s262, 128
          %s264 = scalar_lea.hbm %s2, %s263
          %s265 = sshll.u32 %s254, 4
          %s266 = int_to_ptr.vmem [resolvable:$true] %s265
          %271 = dma.vmem_to_hbm [thread:$0]  %s266, 2048, %s264, %s251, 128, 128, 8
        $region36: #{tpu_custom_call.1} parent=27 // pred_fallthru
          _
      $region28: #{tpu_custom_call.1} parent=5 // pred_fallthru
        _
      %p272 = scmp.le.s32.totalorder 2, %s14
      // Predicated region
      $region37: #{tpu_custom_call.1} parent=5 // pred_check
        %p273 = pneg %p272
      $region38: #{tpu_custom_call.1} parent=5 // pred_check_branch
        %275 = sbr.rel (%p273) target = $region40
      $region39: #{tpu_custom_call.1} parent=5 // pred_region
        %s276 = ssub.s32 %s14, 2
        // Predicated region
        $region41: #{tpu_custom_call.1} parent=39 // pred_check
          %p277 = pneg %p111
        $region42: #{tpu_custom_call.1} parent=39 // pred_check_branch
          %279 = sbr.rel (%p277) target = $region44
        $region43: #{tpu_custom_call.1} parent=39 // pred_region
          %s280 = sand.u32 %s96, 1
          %s281 = scalar_lea.sflag [#allocation4], %s280
          %s282 = sand.u32 %s96, 1
          %s283 = smul.addr %s282, 128
          %s284 = scalar_lea.vmem [#allocation5], %s283
          %285 = dma.done %s281, 2048
        $region44: #{tpu_custom_call.1} parent=39 // pred_fallthru
          _
      $region40: #{tpu_custom_call.1} parent=5 // pred_fallthru
        _
    $region6: #{tpu_custom_call.1} parent=1 // loop_footer
      %s18 = sadd.s32 1, %s14
    $region7: #{tpu_custom_call.1} parent=1 // loop_footer_branch
      %13 = sbr.rel target = $region3
    $region8: #{tpu_custom_call.1} parent=1 // loop_exit
      _
    %286 = vsyncpa [#allocation3], 1
    %s287 = scalar_lea.sflag [#allocation3], 1
    %288 = vsyncpa %s287, 1
    %289 = vsyncpa [#allocation4], 1
    %s290 = scalar_lea.sflag [#allocation4], 1
    %291 = vsyncpa %s290, 1

</llo_original>
